<compile_context>
chip_gen: v5e
topology: v5e:2x2
jax: 0.10.0
libtpu: 0.0.40
codegen_flags: <defaults>
</compile_context>

<pallas_src>
import math
import jax
import jax.numpy as jnp
from jax.experimental import pallas as pl
from jax.experimental.pallas import tpu as pltpu


def _round_up(x: int, m: int) -> int:
    return ((x + m - 1) // m) * m


def _hyper_chattn_kernel(h_ref, wpt_ref, bias_ref, out_ref):
    # h_ref    : (TM, P)   batch tile of hyperparameters
    # wpt_ref  : (P,  Cp)  pre-transposed, channel-padded weight (resident)
    # bias_ref : (1,  Cp)  fused bias = bp + bi + index @ Wi^T   (resident)
    # out_ref  : (TM, Cp)  lane-dense output tile
    out_ref[...] = (
        jnp.dot(h_ref[...], wpt_ref[...], preferred_element_type=jnp.float32)
        + bias_ref[...]
    ).astype(out_ref.dtype)


def hyper_chattn2d_embedder(h, index, wp, bp, wi, bi):
    """h: (*, n_params), index: (n_layers,). Returns (*, n_channels, 1, 1)."""
    n_channels, n_params = wp.shape
    n_layers = wi.shape[1]
    assert h.shape[-1] == n_params
    assert index.shape == (n_layers,)

    batch_dims = h.shape[:-1]
    B = int(math.prod(batch_dims)) if batch_dims else 1

    compute_dtype = h.dtype
    h2d = h.reshape(B, n_params)

    # ---- wrapper-side precompute (tiny; lets the kernel be matmul + bias) ----
    # fused bias = bp + (index @ Wi^T + bi), broadcast over all batch rows.
    bias = (
        bp.astype(jnp.float32)
        + bi.astype(jnp.float32)
        + index.astype(jnp.float32) @ wi.astype(jnp.float32).T
    ).reshape(1, n_channels)
    # pre-transpose Wp once in HBM -> (P, C), channel axis on lanes.
    wpt = jnp.transpose(wp).astype(compute_dtype)  # (P, C)

    # ---- pad channels to a lane-dense multiple of 128, tile the batch -------
    Cp = _round_up(max(n_channels, 1), 128)
    TM = min(256, _round_up(max(B, 1), 8))      # batch tile, multiple of 8
    Bp = _round_up(max(B, 1), TM)

    if Cp != n_channels:
        wpt = jnp.pad(wpt, ((0, 0), (0, Cp - n_channels)))
        bias = jnp.pad(bias, ((0, 0), (0, Cp - n_channels)))
    if Bp != B:
        h2d = jnp.pad(h2d, ((0, Bp - B), (0, 0)))

    bias = bias.astype(jnp.float32)
    n_blocks = Bp // TM

    cost = pl.CostEstimate(
        flops=2 * Bp * Cp * n_params,
        transcendentals=0,
        bytes_accessed=4 * (Bp * n_params + n_params * Cp + Bp * Cp + Cp),
    )

    out = pl.pallas_call(
        _hyper_chattn_kernel,
        out_shape=jax.ShapeDtypeStruct((Bp, Cp), compute_dtype),
        grid=(n_blocks,),
        in_specs=[
            pl.BlockSpec((TM, n_params), lambda i: (i, 0)),   # batch tile
            pl.BlockSpec((n_params, Cp), lambda i: (0, 0)),   # resident weight
            pl.BlockSpec((1, Cp), lambda i: (0, 0)),          # resident bias
        ],
        out_specs=pl.BlockSpec((TM, Cp), lambda i: (i, 0)),
        compiler_params=pltpu.CompilerParams(
            dimension_semantics=("parallel",),
        ),
        cost_estimate=cost,
    )(h2d, wpt, bias)

    out = out[:B, :n_channels]
    return out.reshape(*batch_dims, n_channels, 1, 1)


def _xavier_normal(key, shape, gain):
    # shape = (fan_out, fan_in) for a Linear weight
    fan_out, fan_in = shape
    std = gain * math.sqrt(2.0 / (fan_in + fan_out))
    return std * jax.random.normal(key, shape, dtype=jnp.float32)


def _linear_bias(key, fan_in, fan_out):
    # PyTorch nn.Linear default bias init: U(-1/sqrt(fan_in), 1/sqrt(fan_in))
    bound = 1.0 / math.sqrt(fan_in)
    return jax.random.uniform(key, (fan_out,), jnp.float32, -bound, bound)


if __name__ == "__main__":
    # Module config (small, consistent with the forward signature)
    n_params, n_layers, n_channels = 4, 3, 32
    batch = 2

    key = jax.random.PRNGKey(0)
    k_h, k_wp, k_bp, k_wi, k_bi = jax.random.split(key, 5)

    # Deterministic parameter init (xavier_normal_ with gain=0.002, as in the module)
    wp = _xavier_normal(k_wp, (n_channels, n_params), gain=0.002)
    bp = _linear_bias(k_bp, n_params, n_channels)
    wi = _xavier_normal(k_wi, (n_channels, n_layers), gain=0.002)
    bi = _linear_bias(k_bi, n_layers, n_channels)

    # Inputs: h (*, n_params), index one-hot of length n_layers
    h = jax.random.normal(k_h, (batch, n_params), dtype=jnp.float32)
    index = jnp.zeros((n_layers,), jnp.float32).at[1].set(1.0)

    w = hyper_chattn2d_embedder(h, index, wp, bp, wi, bi)
    w = jax.block_until_ready(w)

    # Pure-JAX reference check
    ref = (h @ wp.T + bp) + (index @ wi.T + bi)
    ref = ref.reshape(batch, n_channels, 1, 1)
    assert w.shape == (batch, n_channels, 1, 1), w.shape
    assert jnp.allclose(w, ref, atol=1e-5, rtol=1e-5)

    print("KERNEL_OK")
</pallas_src>

<mosaic_0001>
module attributes {stable_mosaic.version = 11 : i64} {
  func.func @_hyper_chattn_kernel(%arg0: i32, %arg1: memref<8x4xf32, #tpu.memory_space<vmem>>, %arg2: memref<4x128xf32, #tpu.memory_space<vmem>>, %arg3: memref<1x128xf32, #tpu.memory_space<vmem>>, %arg4: memref<8x128xf32, #tpu.memory_space<vmem>>) attributes {dimension_semantics = [#tpu.dimension_semantics<parallel>], iteration_bounds = array<i64: 1>, scalar_prefetch = 0 : i64, scratch_operands = 0 : i64, tpu.core_type = #tpu.core_type<tc>, window_params = [{transform_indices = @transform_0, window_bounds = array<i64: 8, 4>}, {pipeline_mode = #tpu.pipeline_mode<synchronous>, transform_indices = @transform_1, window_bounds = array<i64: 4, 128>}, {pipeline_mode = #tpu.pipeline_mode<synchronous>, transform_indices = @transform_2, window_bounds = array<i64: 1, 128>}, {transform_indices = @transform_3, window_bounds = array<i64: 8, 128>}]} {
    %c0 = arith.constant 0 : index
    %c0_0 = arith.constant 0 : index
    %0 = vector.load %arg1[%c0, %c0_0] : memref<8x4xf32, #tpu.memory_space<vmem>>, vector<8x4xf32>
    %c0_1 = arith.constant 0 : index
    %c0_2 = arith.constant 0 : index
    %1 = vector.load %arg2[%c0_1, %c0_2] : memref<4x128xf32, #tpu.memory_space<vmem>>, vector<4x128xf32>
    %cst = arith.constant dense<0.000000e+00> : vector<8x128xf32>
    %2 = tpu.matmul %0, %1, %cst {dimension_numbers = #tpu.dot_dimension_numbers<[1], [0], [0], [1], [0, 0, 1, 1], [], []>} : vector<8x4xf32>, vector<4x128xf32>, vector<8x128xf32> -> vector<8x128xf32>
    %c0_3 = arith.constant 0 : index
    %c0_4 = arith.constant 0 : index
    %3 = vector.load %arg3[%c0_3, %c0_4] : memref<1x128xf32, #tpu.memory_space<vmem>>, vector<1x128xf32>
    %4 = vector.broadcast %3 : vector<1x128xf32> to vector<8x128xf32>
    %5 = arith.addf %2, %4 : vector<8x128xf32>
    %c0_5 = arith.constant 0 : index
    %c0_6 = arith.constant 0 : index
    %6 = vector.load %arg4[%c0_5, %c0_6] : memref<8x128xf32, #tpu.memory_space<vmem>>, vector<8x128xf32>
    tpu.vector_store %arg4[%c0_5, %c0_6], %5 {strides = array<i32>} : memref<8x128xf32, #tpu.memory_space<vmem>>, vector<8x128xf32>,
    return
  }
  func.func @transform_0(%arg0: i32) -> (i32, i32) {
    %c0_i32 = arith.constant 0 : i32
    %c0_i32_0 = arith.constant 0 : i32
    return %arg0, %c0_i32 : i32, i32
  }
  func.func @transform_1(%arg0: i32) -> (i32, i32) {
    %c0_i32 = arith.constant 0 : i32
    %c0_i32_0 = arith.constant 0 : i32
    %c0_i32_1 = arith.constant 0 : i32
    return %c0_i32, %c0_i32_0 : i32, i32
  }
  func.func @transform_2(%arg0: i32) -> (i32, i32) {
    %c0_i32 = arith.constant 0 : i32
    %c0_i32_0 = arith.constant 0 : i32
    %c0_i32_1 = arith.constant 0 : i32
    return %c0_i32, %c0_i32_0 : i32, i32
  }
  func.func @transform_3(%arg0: i32) -> (i32, i32) {
    %c0_i32 = arith.constant 0 : i32
    %c0_i32_0 = arith.constant 0 : i32
    return %arg0, %c0_i32 : i32, i32
  }
}

</mosaic_0001>

<llo_original>
// kernel: tpu_custom_call.1
$region0: #{tpu_custom_call.1}
  #allocation0 [shape = 'u32[]', space=smem, size = 0x4, offset = 0x4, fixed_abs, tag = 'smem constant byte address 0x4 - core index']
  #allocation1 [shape = 'u32[72,128]{1,0:T(1,128)}', space=vmem, size = 0x9000, scoped, tag = 'internal scratch']
  %s0 = inlined_call_operand.vmem [shape: f32[8,4], index: 0, kind: input, shape index: {}]
  %s1 = inlined_call_operand.vmem [shape: f32[4,128], index: 1, kind: input, shape index: {}]
  %s2 = inlined_call_operand.vmem [shape: f32[1,128], index: 2, kind: input, shape index: {}]
  %s3 = inlined_call_operand.hbm [shape: f32[8,128], index: 3, kind: output, shape index: {}]
  %s4 = sld [smem:[#allocation0]]
  $region22: #{tpu_custom_call.1} parent=0
    _
  %s6 = ssub.s32 1, %s4
  %s7 = scalar_select 0, %s6, %s4
  $region1: #{tpu_custom_call.1} parent=0
    #allocation2 [shape = 'u8[4096]{0}', space=vmem, size = 0x1000, scoped, tag = 'output window, operand 0, single buffered']
    #allocation3 [shape = 's32[1]{0}', space=sflag, size = 0x4, scoped, tag = 'scoped memory for tpu_custom_call.1']
    %8 = vsyncpa [#allocation3], 0
    // Predicated region
    $region2: #{tpu_custom_call.1} parent=1 // pred_check
      _
    $region3: #{tpu_custom_call.1} parent=1 // pred_check_branch
      %10 = sbr.rel (0) target = $region5
    $region4: #{tpu_custom_call.1} parent=1 // pred_region
      _
    $region5: #{tpu_custom_call.1} parent=1 // pred_fallthru
      _
    // Predicated region
    $region6: #{tpu_custom_call.1} parent=1 // pred_check
      _
    $region7: #{tpu_custom_call.1} parent=1 // pred_check_branch
      %12 = sbr.rel (0) target = $region9
    $region8: #{tpu_custom_call.1} parent=1 // pred_region
      _
    $region9: #{tpu_custom_call.1} parent=1 // pred_fallthru
      _
    // Predicated region
    $region10: #{tpu_custom_call.1} parent=1 // pred_check
      _
    $region11: #{tpu_custom_call.1} parent=1 // pred_check_branch
      %14 = sbr.rel (0) target = $region13
    $region12: #{tpu_custom_call.1} parent=1 // pred_region
      _
    $region13: #{tpu_custom_call.1} parent=1 // pred_fallthru
      _
    %v15 = vld [vmem:[%s0] sm:$0xff]
    %v16 = vld [vmem:[%s1] sm:$0xf]
    %v17 = vld [vmem:[%s2] sm:$0x1]
    %v19 = vperm.slane %v17, 0
    %vm21 = vcmask 31744
    %v23 = vsel %vm21, %v15, 0
    %vm25 = vcmask 1043456
    %v27 = vsel %vm25, %v16, 0
    %29 = vmatpush.msra.mxu0 0.0
    %30 = vmatpush.msra.mxu0 0.0
    %31 = vmatpush.msra.mxu0 0.0
    %32 = vmatpush.msra.mxu0 0.0
    %33 = vmatpush.msra.mxu0 0.0
    %34 = vmatpush.msra.mxu0 0.0
    %35 = vmatpush.msra.mxu0 0.0
    %36 = vmatpush.msra.mxu0 0.0
    %37 = vmatpush.msra.mxu0 0.0
    %38 = vmatpush.msra.mxu0 0.0
    %39 = vmatpush.msra.mxu0 0.0
    %40 = vmatpush.msra.mxu0 0.0
    %41 = vmatpush.msra.mxu0 0.0
    %42 = vmatpush.msra.mxu0 0.0
    %43 = vmatpush.msra.mxu0 0.0
    %44 = vmatpush.msra.mxu0 %v27
    %45 = vmatmul.f32.gmra.mxu0 %v23
    %v46 = vpop.f32.mrf.mxu0
    %v47 = vadd.f32 %v19, %v46
    %48 = vdwg.mxu0
    %49 = vst [vmem:[#allocation2] sm:$0xff] %v47
    // Predicated region
    $region14: #{tpu_custom_call.1} parent=1 // pred_check
      _
    $region15: #{tpu_custom_call.1} parent=1 // pred_check_branch
      %51 = sbr.rel (0) target = $region17
    $region16: #{tpu_custom_call.1} parent=1 // pred_region
      %53 = vsyncadd [#allocation3], 0
      %s55 = sshll.u32 [#allocation2], 4
      %s56 = int_to_ptr.vmem [resolvable:$true] %s55
      %s57 = sshll.u32 %s3, 4
      %s58 = int_to_ptr.hbm [resolvable:$true] %s57
      %60 = dma.vmem_to_hbm [thread:$0]  %s56, 128, %s58, [#allocation3]
    $region17: #{tpu_custom_call.1} parent=1 // pred_fallthru
      _
    // Predicated region
    $region18: #{tpu_custom_call.1} parent=1 // pred_check
      _
    $region19: #{tpu_custom_call.1} parent=1 // pred_check_branch
      %62 = sbr.rel (0) target = $region21
    $region20: #{tpu_custom_call.1} parent=1 // pred_region
      %64 = dma.done [#allocation3], 128
    $region21: #{tpu_custom_call.1} parent=1 // pred_fallthru
      _
    %65 = vsyncpa [#allocation3], 1

</llo_original>
